<compile_context>
chip_gen: v7x
topology: tpu7x:2x2x1
jax: 0.10.0
libtpu: 0.0.40
codegen_flags: <defaults>
</compile_context>

<pallas_src>
import functools

import jax
import jax.numpy as jnp
from jax.experimental import pallas as pl
from jax.experimental.pallas import tpu as pltpu


def _round_up(n, m):
    return ((n + m - 1) // m) * m


def _align_feature(d):
    # v6e/v7x MXU is 2x256x256: align dims >=256 to 256; smaller dims stay
    # lane-aligned (128), which is already optimal on v5e's 4x128x128 MXU.
    return _round_up(d, 256) if d >= 256 else _round_up(d, 128)


def _leaky_relu_f32(h, slope):
    # max/min form: ~4 VALU ops (max, min, mul, add) on the f32 accumulator.
    # MXU/DMA is the binding unit here so this is free filler; switch to
    # `h * jnp.where(h >= 0, 1.0, slope)` (3 ops) only if a bundle dump ever
    # shows the VALU slot saturating.
    return jnp.maximum(h, 0.0) + slope * jnp.minimum(h, 0.0)


def ffnn_kernel(x_ref, w1_ref, b1_ref, w2_ref, b2_ref, w3_ref, b3_ref, o_ref, *, slope):
    # Layer 1: [TB, Din] @ [Din, H1], bf16 operands, f32 accumulation.
    h = jnp.dot(x_ref[...], w1_ref[...], preferred_element_type=jnp.float32)
    h = _leaky_relu_f32(h + b1_ref[...], slope)
    # Layer 2
    h = jnp.dot(h.astype(jnp.bfloat16), w2_ref[...], preferred_element_type=jnp.float32)
    h = _leaky_relu_f32(h + b2_ref[...], slope)
    # Layer 3 (activation applied to the output layer too, matching PyTorch forward()).
    h = jnp.dot(h.astype(jnp.bfloat16), w3_ref[...], preferred_element_type=jnp.float32)
    h = _leaky_relu_f32(h + b3_ref[...], slope)
    o_ref[...] = h.astype(o_ref.dtype)


def prepare_params(params):
    """One-time parameter prep: pad feature dims, cast weights to bf16.

    Call once at init and reuse the result for every forward call — doing this
    inside the forward pass costs a full HBM pass over all parameters per call.
    Weights stored as [in, out] so the kernel computes x @ W directly.
    """
    w1, b1, w2, b2, w3, b3 = (params[k] for k in ("w1", "b1", "w2", "b2", "w3", "b3"))
    d_in, h1 = w1.shape
    h2 = w2.shape[1]
    d_out = w3.shape[1]
    d_in_p, h1_p, h2_p, d_out_p = (_align_feature(d) for d in (d_in, h1, h2, d_out))

    pad2 = lambda a, r, c: jnp.pad(a, ((0, r - a.shape[0]), (0, c - a.shape[1])))
    return {
        # bf16 weights: native MXU operand format, half the DMA bytes.
        "w1": pad2(w1, d_in_p, h1_p).astype(jnp.bfloat16),
        "w2": pad2(w2, h1_p, h2_p).astype(jnp.bfloat16),
        "w3": pad2(w3, h2_p, d_out_p).astype(jnp.bfloat16),
        # Biases stay f32: added on the f32 accumulator.
        "b1": pad2(b1, 1, h1_p),
        "b2": pad2(b2, 1, h2_p),
        "b3": pad2(b3, 1, d_out_p),
        "dims": (d_in, h1, h2, d_out),
        "padded_dims": (d_in_p, h1_p, h2_p, d_out_p),
    }


def _vmem_capacity_bytes():
    try:
        cap = getattr(pltpu.get_tpu_info(), "vmem_capacity_bytes", None)
        if cap:
            return int(cap)
    except Exception:
        pass
    return 64 * 1024 * 1024  # conservative floor (v7x per-TC VMEM)


def _act_tile_bytes(tb, d_in_p, h1_p, h2_p, d_out_p):
    # Double-buffered bf16 x tile + double-buffered f32 out tile + ~2 live f32
    # intermediate activations.
    return (2 * tb * d_in_p * 2) + (2 * tb * d_out_p * 4) + tb * (h1_p + h2_p) * 4


def _choose_tb(B, d_in_p, h1_p, h2_p, d_out_p, weight_bytes, vmem_cap):
    B8 = _round_up(B, 8)
    if B8 <= 128:
        return B8  # single small tile; nothing to pipeline / shard at this size
    budget = int(0.7 * vmem_cap) - 2 * weight_bytes  # room for weights + compiler scratch
    # Largest TB in {512, 256, 128} that fits VMEM AND leaves >= 2 grid steps so
    # the "parallel" batch axis gives both v7x TensorCores work.
    for tb in (512, 256, 128):
        if 2 * tb <= B8 and _act_tile_bytes(tb, d_in_p, h1_p, h2_p, d_out_p) <= budget:
            return tb
    return 128


def _vmem_limit_bytes(weight_bytes, bias_bytes, tb, d_in_p, h1_p, h2_p, d_out_p, vmem_cap):
    # Worst case: weights/biases double-buffered (fallback path), plus activation
    # tiles and intermediates, plus headroom for compiler internal scratch.
    needed = 2 * (weight_bytes + bias_bytes) + _act_tile_bytes(tb, d_in_p, h1_p, h2_p, d_out_p)
    limit = max(needed + (8 << 20), 32 << 20)
    # Never request the whole physical VMEM (especially on v7x's 64 MiB).
    return min(limit, int(0.85 * vmem_cap))


def ffnn_forward(x, prepared, slope, out_dtype=jnp.float32):
    """x: [B, input_size] float32. prepared: output of prepare_params()."""
    w1, b1, w2, b2, w3, b3 = (prepared[k] for k in ("w1", "b1", "w2", "b2", "w3", "b3"))
    d_in, _, _, d_out = prepared["dims"]
    d_in_p, h1_p, h2_p, d_out_p = prepared["padded_dims"]

    B = x.shape[0]
    assert x.shape[1] == d_in, (x.shape, d_in)

    weight_bytes = sum(int(a.size) * a.dtype.itemsize for a in (w1, w2, w3))
    bias_bytes = 8 * (h1_p + h2_p + d_out_p) * 4  # sublane-padded f32 biases
    vmem_cap = _vmem_capacity_bytes()

    TB = _choose_tb(B, d_in_p, h1_p, h2_p, d_out_p, weight_bytes, vmem_cap)
    B_p = _round_up(B, TB)
    nb = B_p // TB

    # Only the activations are touched per call; parameters come in pre-padded/cast.
    x_p = jnp.pad(x, ((0, B_p - B), (0, d_in_p - d_in))).astype(jnp.bfloat16)

    kernel = functools.partial(ffnn_kernel, slope=slope)
    out_shape = jax.ShapeDtypeStruct((B_p, d_out_p), out_dtype)
    compiler_params = pltpu.CompilerParams(
        dimension_semantics=("parallel",),
        vmem_limit_bytes=_vmem_limit_bytes(
            weight_bytes, bias_bytes, TB, d_in_p, h1_p, h2_p, d_out_p, vmem_cap),
    )

    def build(single_buffer_weights):
        if single_buffer_weights:
            # Constant index_map -> block never changes; 1 VMEM buffer is enough.
            resident = lambda a: pl.BlockSpec(a.shape, lambda i: (0, 0),
                                              pipeline_mode=pl.Buffered(1))
        else:
            resident = lambda a: pl.BlockSpec(a.shape, lambda i: (0, 0))
        return pl.pallas_call(
            kernel,
            out_shape=out_shape,
            grid=(nb,),
            in_specs=[
                pl.BlockSpec((TB, d_in_p), lambda i: (i, 0)),  # x: tiled over batch
                resident(w1), resident(b1),
                resident(w2), resident(b2),
                resident(w3), resident(b3),
            ],
            out_specs=pl.BlockSpec((TB, d_out_p), lambda i: (i, 0)),
            compiler_params=compiler_params,
        )

    # Prefer single-buffered resident weights (halves weight VMEM, biggest win on
    # v7x); fall back to default double-buffering if this JAX build rejects
    # pipeline_mode on the pallas_call grid path.
    try:
        out_p = build(single_buffer_weights=True)(x_p, w1, b1, w2, b2, w3, b3)
    except Exception:
        out_p = build(single_buffer_weights=False)(x_p, w1, b1, w2, b2, w3, b3)

    # TODO(synk): once resident weights exceed ~half of VMEM (hits first on v7x),
    # split the widest layer over an N-tiled grid axis (or a K-reduction axis with
    # an f32 VMEM accumulator + pl.when init/finalize) instead of fully-resident
    # weights; also consider a cross-call weight-prefetch future for 1-step grids.
    return out_p[:B, :d_out]


def kaiming_normal(key, fan_in, fan_out, slope):
    # Matches torch kaiming_normal_(a=slope, nonlinearity='leaky_relu') statistics:
    # std = gain / sqrt(fan_in), gain = sqrt(2 / (1 + slope^2)).
    gain = (2.0 / (1.0 + slope * slope)) ** 0.5
    std = gain / (fan_in ** 0.5)
    # Stored as [fan_in, fan_out] (transposed vs torch's [out, in]) for direct x @ W.
    return std * jax.random.normal(key, (fan_in, fan_out), dtype=jnp.float32)


def init_params(key, input_size, hidden1, hidden2, output_size, slope):
    k1, k2, k3, kb1, kb2, kb3 = jax.random.split(key, 6)

    def bias(k, fan_in, n):
        # torch nn.Linear default bias init: U(-1/sqrt(fan_in), 1/sqrt(fan_in)).
        bound = 1.0 / (fan_in ** 0.5)
        return jax.random.uniform(k, (1, n), jnp.float32, -bound, bound)

    return {
        "w1": kaiming_normal(k1, input_size, hidden1, slope),
        "b1": bias(kb1, input_size, hidden1),
        "w2": kaiming_normal(k2, hidden1, hidden2, slope),
        "b2": bias(kb2, hidden1, hidden2),
        "w3": kaiming_normal(k3, hidden2, output_size, slope),
        "b3": bias(kb3, hidden2, output_size),
    }


if __name__ == "__main__":
    input_size, hidden1, hidden2, output_size = 16, 32, 32, 8
    slope = 0.01
    batch = 8
    # drop_out is a constructor arg of the PyTorch module but Dropout is never
    # applied in forward(), so it is intentionally unused here.

    key = jax.random.PRNGKey(0)
    kx, kp = jax.random.split(key)
    x = jax.random.normal(kx, (batch, input_size), dtype=jnp.float32)
    params = init_params(kp, input_size, hidden1, hidden2, output_size, slope)

    # One-time parameter prep (pad + bf16 cast) — kept out of the forward path.
    prepared = jax.block_until_ready(prepare_params(params))

    out = ffnn_forward(x, prepared, slope)
    out = jax.block_until_ready(out)

    # Reference check in plain JAX (f32 throughout).
    def ref(x, p):
        def lrelu(h):
            return jnp.maximum(h, 0.0) + slope * jnp.minimum(h, 0.0)
        h = lrelu(x @ p["w1"] + p["b1"])
        h = lrelu(h @ p["w2"] + p["b2"])
        h = lrelu(h @ p["w3"] + p["b3"])
        return h

    expected = ref(x, params)
    assert out.shape == (batch, output_size)
    # Tolerance relaxed for bf16 MXU operands (f32 accumulation); error compounds
    # over 3 layers, so re-validate if hidden sizes / value ranges grow.
    assert jnp.allclose(out, expected, atol=2e-2, rtol=2e-2), (
        float(jnp.max(jnp.abs(out - expected))))

    print("KERNEL_OK")
</pallas_src>

<mosaic_0001>
module attributes {stable_mosaic.version = 11 : i64} {
  func.func @ffnn_kernel(%arg0: i32, %arg1: memref<8x128xbf16, #tpu.memory_space<vmem>>, %arg2: memref<128x128xbf16, #tpu.memory_space<vmem>>, %arg3: memref<1x128xf32, #tpu.memory_space<vmem>>, %arg4: memref<128x128xbf16, #tpu.memory_space<vmem>>, %arg5: memref<1x128xf32, #tpu.memory_space<vmem>>, %arg6: memref<128x128xbf16, #tpu.memory_space<vmem>>, %arg7: memref<1x128xf32, #tpu.memory_space<vmem>>, %arg8: memref<8x128xf32, #tpu.memory_space<vmem>>) attributes {dimension_semantics = [#tpu.dimension_semantics<parallel>], iteration_bounds = array<i64: 1>, scalar_prefetch = 0 : i64, scratch_operands = 0 : i64, tpu.core_type = #tpu.core_type<tc>, window_params = [{transform_indices = @transform_0, window_bounds = array<i64: 8, 128>}, {pipeline_mode = #tpu.pipeline_mode<synchronous>, transform_indices = @transform_1, window_bounds = array<i64: 128, 128>}, {pipeline_mode = #tpu.pipeline_mode<synchronous>, transform_indices = @transform_2, window_bounds = array<i64: 1, 128>}, {pipeline_mode = #tpu.pipeline_mode<synchronous>, transform_indices = @transform_3, window_bounds = array<i64: 128, 128>}, {pipeline_mode = #tpu.pipeline_mode<synchronous>, transform_indices = @transform_4, window_bounds = array<i64: 1, 128>}, {pipeline_mode = #tpu.pipeline_mode<synchronous>, transform_indices = @transform_5, window_bounds = array<i64: 128, 128>}, {pipeline_mode = #tpu.pipeline_mode<synchronous>, transform_indices = @transform_6, window_bounds = array<i64: 1, 128>}, {transform_indices = @transform_7, window_bounds = array<i64: 8, 128>}]} {
    %c0 = arith.constant 0 : index
    %c0_0 = arith.constant 0 : index
    %0 = vector.load %arg1[%c0, %c0_0] : memref<8x128xbf16, #tpu.memory_space<vmem>>, vector<8x128xbf16>
    %c0_1 = arith.constant 0 : index
    %c0_2 = arith.constant 0 : index
    %1 = vector.load %arg2[%c0_1, %c0_2] : memref<128x128xbf16, #tpu.memory_space<vmem>>, vector<128x128xbf16>
    %cst = arith.constant dense<0.000000e+00> : vector<8x128xf32>
    %2 = tpu.matmul %0, %1, %cst {dimension_numbers = #tpu.dot_dimension_numbers<[1], [0], [0], [1], [0, 0, 1, 1], [], []>} : vector<8x128xbf16>, vector<128x128xbf16>, vector<8x128xf32> -> vector<8x128xf32>
    %c0_3 = arith.constant 0 : index
    %c0_4 = arith.constant 0 : index
    %3 = vector.load %arg3[%c0_3, %c0_4] : memref<1x128xf32, #tpu.memory_space<vmem>>, vector<1x128xf32>
    %4 = vector.broadcast %3 : vector<1x128xf32> to vector<8x128xf32>
    %5 = arith.addf %2, %4 : vector<8x128xf32>
    %cst_5 = arith.constant 0.000000e+00 : f32
    %6 = vector.broadcast %cst_5 : f32 to vector<8x128xf32>
    %7 = arith.maximumf %5, %6 : vector<8x128xf32>
    %cst_6 = arith.constant 0.000000e+00 : f32
    %8 = vector.broadcast %cst_6 : f32 to vector<8x128xf32>
    %9 = arith.minimumf %5, %8 : vector<8x128xf32>
    %cst_7 = arith.constant 0.00999999977 : f32
    %10 = vector.broadcast %cst_7 : f32 to vector<8x128xf32>
    %11 = arith.mulf %10, %9 : vector<8x128xf32>
    %12 = arith.addf %7, %11 : vector<8x128xf32>
    %13 = arith.truncf %12 : vector<8x128xf32> to vector<8x128xbf16>
    %c0_8 = arith.constant 0 : index
    %c0_9 = arith.constant 0 : index
    %14 = vector.load %arg4[%c0_8, %c0_9] : memref<128x128xbf16, #tpu.memory_space<vmem>>, vector<128x128xbf16>
    %cst_10 = arith.constant dense<0.000000e+00> : vector<8x128xf32>
    %15 = tpu.matmul %13, %14, %cst_10 {dimension_numbers = #tpu.dot_dimension_numbers<[1], [0], [0], [1], [0, 0, 1, 1], [], []>} : vector<8x128xbf16>, vector<128x128xbf16>, vector<8x128xf32> -> vector<8x128xf32>
    %c0_11 = arith.constant 0 : index
    %c0_12 = arith.constant 0 : index
    %16 = vector.load %arg5[%c0_11, %c0_12] : memref<1x128xf32, #tpu.memory_space<vmem>>, vector<1x128xf32>
    %17 = vector.broadcast %16 : vector<1x128xf32> to vector<8x128xf32>
    %18 = arith.addf %15, %17 : vector<8x128xf32>
    %cst_13 = arith.constant 0.000000e+00 : f32
    %19 = vector.broadcast %cst_13 : f32 to vector<8x128xf32>
    %20 = arith.maximumf %18, %19 : vector<8x128xf32>
    %cst_14 = arith.constant 0.000000e+00 : f32
    %21 = vector.broadcast %cst_14 : f32 to vector<8x128xf32>
    %22 = arith.minimumf %18, %21 : vector<8x128xf32>
    %cst_15 = arith.constant 0.00999999977 : f32
    %23 = vector.broadcast %cst_15 : f32 to vector<8x128xf32>
    %24 = arith.mulf %23, %22 : vector<8x128xf32>
    %25 = arith.addf %20, %24 : vector<8x128xf32>
    %26 = arith.truncf %25 : vector<8x128xf32> to vector<8x128xbf16>
    %c0_16 = arith.constant 0 : index
    %c0_17 = arith.constant 0 : index
    %27 = vector.load %arg6[%c0_16, %c0_17] : memref<128x128xbf16, #tpu.memory_space<vmem>>, vector<128x128xbf16>
    %cst_18 = arith.constant dense<0.000000e+00> : vector<8x128xf32>
    %28 = tpu.matmul %26, %27, %cst_18 {dimension_numbers = #tpu.dot_dimension_numbers<[1], [0], [0], [1], [0, 0, 1, 1], [], []>} : vector<8x128xbf16>, vector<128x128xbf16>, vector<8x128xf32> -> vector<8x128xf32>
    %c0_19 = arith.constant 0 : index
    %c0_20 = arith.constant 0 : index
    %29 = vector.load %arg7[%c0_19, %c0_20] : memref<1x128xf32, #tpu.memory_space<vmem>>, vector<1x128xf32>
    %30 = vector.broadcast %29 : vector<1x128xf32> to vector<8x128xf32>
    %31 = arith.addf %28, %30 : vector<8x128xf32>
    %cst_21 = arith.constant 0.000000e+00 : f32
    %32 = vector.broadcast %cst_21 : f32 to vector<8x128xf32>
    %33 = arith.maximumf %31, %32 : vector<8x128xf32>
    %cst_22 = arith.constant 0.000000e+00 : f32
    %34 = vector.broadcast %cst_22 : f32 to vector<8x128xf32>
    %35 = arith.minimumf %31, %34 : vector<8x128xf32>
    %cst_23 = arith.constant 0.00999999977 : f32
    %36 = vector.broadcast %cst_23 : f32 to vector<8x128xf32>
    %37 = arith.mulf %36, %35 : vector<8x128xf32>
    %38 = arith.addf %33, %37 : vector<8x128xf32>
    %c0_24 = arith.constant 0 : index
    %c0_25 = arith.constant 0 : index
    %39 = vector.load %arg8[%c0_24, %c0_25] : memref<8x128xf32, #tpu.memory_space<vmem>>, vector<8x128xf32>
    tpu.vector_store %arg8[%c0_24, %c0_25], %38 {strides = array<i32>} : memref<8x128xf32, #tpu.memory_space<vmem>>, vector<8x128xf32>,
    return
  }
  func.func @transform_0(%arg0: i32) -> (i32, i32) {
    %c0_i32 = arith.constant 0 : i32
    %c0_i32_0 = arith.constant 0 : i32
    return %arg0, %c0_i32 : i32, i32
  }
  func.func @transform_1(%arg0: i32) -> (i32, i32) {
    %c0_i32 = arith.constant 0 : i32
    %c0_i32_0 = arith.constant 0 : i32
    %c0_i32_1 = arith.constant 0 : i32
    return %c0_i32, %c0_i32_0 : i32, i32
  }
  func.func @transform_2(%arg0: i32) -> (i32, i32) {
    %c0_i32 = arith.constant 0 : i32
    %c0_i32_0 = arith.constant 0 : i32
    %c0_i32_1 = arith.constant 0 : i32
    return %c0_i32, %c0_i32_0 : i32, i32
  }
  func.func @transform_3(%arg0: i32) -> (i32, i32) {
    %c0_i32 = arith.constant 0 : i32
    %c0_i32_0 = arith.constant 0 : i32
    %c0_i32_1 = arith.constant 0 : i32
    return %c0_i32, %c0_i32_0 : i32, i32
  }
  func.func @transform_4(%arg0: i32) -> (i32, i32) {
    %c0_i32 = arith.constant 0 : i32
    %c0_i32_0 = arith.constant 0 : i32
    %c0_i32_1 = arith.constant 0 : i32
    return %c0_i32, %c0_i32_0 : i32, i32
  }
  func.func @transform_5(%arg0: i32) -> (i32, i32) {
    %c0_i32 = arith.constant 0 : i32
    %c0_i32_0 = arith.constant 0 : i32
    %c0_i32_1 = arith.constant 0 : i32
    return %c0_i32, %c0_i32_0 : i32, i32
  }
  func.func @transform_6(%arg0: i32) -> (i32, i32) {
    %c0_i32 = arith.constant 0 : i32
    %c0_i32_0 = arith.constant 0 : i32
    %c0_i32_1 = arith.constant 0 : i32
    return %c0_i32, %c0_i32_0 : i32, i32
  }
  func.func @transform_7(%arg0: i32) -> (i32, i32) {
    %c0_i32 = arith.constant 0 : i32
    %c0_i32_0 = arith.constant 0 : i32
    return %arg0, %c0_i32 : i32, i32
  }
}

module attributes {stable_mosaic.version = 11 : i64} {
  func.func @ffnn_kernel(%arg0: i32, %arg1: memref<8x128xbf16, #tpu.memory_space<vmem>>, %arg2: memref<128x128xbf16, #tpu.memory_space<vmem>>, %arg3: memref<1x128xf32, #tpu.memory_space<vmem>>, %arg4: memref<128x128xbf16, #tpu.memory_space<vmem>>, %arg5: memref<1x128xf32, #tpu.memory_space<vmem>>, %arg6: memref<128x128xbf16, #tpu.memory_space<vmem>>, %arg7: memref<1x128xf32, #tpu.memory_space<vmem>>, %arg8: memref<8x128xf32, #tpu.memory_space<vmem>>) attributes {dimension_semantics = [#tpu.dimension_semantics<parallel>], iteration_bounds = array<i64: 1>, scalar_prefetch = 0 : i64, scratch_operands = 0 : i64, tpu.core_type = #tpu.core_type<tc>, window_params = [{transform_indices = @transform_0, window_bounds = array<i64: 8, 128>}, {pipeline_mode = #tpu.pipeline_mode<synchronous>, transform_indices = @transform_1, window_bounds = array<i64: 128, 128>}, {pipeline_mode = #tpu.pipeline_mode<synchronous>, transform_indices = @transform_2, window_bounds = array<i64: 1, 128>}, {pipeline_mode = #tpu.pipeline_mode<synchronous>, transform_indices = @transform_3, window_bounds = array<i64: 128, 128>}, {pipeline_mode = #tpu.pipeline_mode<synchronous>, transform_indices = @transform_4, window_bounds = array<i64: 1, 128>}, {pipeline_mode = #tpu.pipeline_mode<synchronous>, transform_indices = @transform_5, window_bounds = array<i64: 128, 128>}, {pipeline_mode = #tpu.pipeline_mode<synchronous>, transform_indices = @transform_6, window_bounds = array<i64: 1, 128>}, {transform_indices = @transform_7, window_bounds = array<i64: 8, 128>}]} {
    %c0 = arith.constant 0 : index
    %c0_0 = arith.constant 0 : index
    %0 = vector.load %arg1[%c0, %c0_0] : memref<8x128xbf16, #tpu.memory_space<vmem>>, vector<8x128xbf16>
    %c0_1 = arith.constant 0 : index
    %c0_2 = arith.constant 0 : index
    %1 = vector.load %arg2[%c0_1, %c0_2] : memref<128x128xbf16, #tpu.memory_space<vmem>>, vector<128x128xbf16>
    %cst = arith.constant dense<0.000000e+00> : vector<8x128xf32>
    %2 = tpu.matmul %0, %1, %cst {dimension_numbers = #tpu.dot_dimension_numbers<[1], [0], [0], [1], [0, 0, 1, 1], [], []>} : vector<8x128xbf16>, vector<128x128xbf16>, vector<8x128xf32> -> vector<8x128xf32>
    %c0_3 = arith.constant 0 : index
    %c0_4 = arith.constant 0 : index
    %3 = vector.load %arg3[%c0_3, %c0_4] : memref<1x128xf32, #tpu.memory_space<vmem>>, vector<1x128xf32>
    %4 = vector.broadcast %3 : vector<1x128xf32> to vector<8x128xf32>
    %5 = arith.addf %2, %4 : vector<8x128xf32>
    %cst_5 = arith.constant 0.000000e+00 : f32
    %6 = vector.broadcast %cst_5 : f32 to vector<8x128xf32>
    %7 = arith.maximumf %5, %6 : vector<8x128xf32>
    %cst_6 = arith.constant 0.000000e+00 : f32
    %8 = vector.broadcast %cst_6 : f32 to vector<8x128xf32>
    %9 = arith.minimumf %5, %8 : vector<8x128xf32>
    %cst_7 = arith.constant 0.00999999977 : f32
    %10 = vector.broadcast %cst_7 : f32 to vector<8x128xf32>
    %11 = arith.mulf %10, %9 : vector<8x128xf32>
    %12 = arith.addf %7, %11 : vector<8x128xf32>
    %13 = arith.truncf %12 : vector<8x128xf32> to vector<8x128xbf16>
    %c0_8 = arith.constant 0 : index
    %c0_9 = arith.constant 0 : index
    %14 = vector.load %arg4[%c0_8, %c0_9] : memref<128x128xbf16, #tpu.memory_space<vmem>>, vector<128x128xbf16>
    %cst_10 = arith.constant dense<0.000000e+00> : vector<8x128xf32>
    %15 = tpu.matmul %13, %14, %cst_10 {dimension_numbers = #tpu.dot_dimension_numbers<[1], [0], [0], [1], [0, 0, 1, 1], [], []>} : vector<8x128xbf16>, vector<128x128xbf16>, vector<8x128xf32> -> vector<8x128xf32>
    %c0_11 = arith.constant 0 : index
    %c0_12 = arith.constant 0 : index
    %16 = vector.load %arg5[%c0_11, %c0_12] : memref<1x128xf32, #tpu.memory_space<vmem>>, vector<1x128xf32>
    %17 = vector.broadcast %16 : vector<1x128xf32> to vector<8x128xf32>
    %18 = arith.addf %15, %17 : vector<8x128xf32>
    %cst_13 = arith.constant 0.000000e+00 : f32
    %19 = vector.broadcast %cst_13 : f32 to vector<8x128xf32>
    %20 = arith.maximumf %18, %19 : vector<8x128xf32>
    %cst_14 = arith.constant 0.000000e+00 : f32
    %21 = vector.broadcast %cst_14 : f32 to vector<8x128xf32>
    %22 = arith.minimumf %18, %21 : vector<8x128xf32>
    %cst_15 = arith.constant 0.00999999977 : f32
    %23 = vector.broadcast %cst_15 : f32 to vector<8x128xf32>
    %24 = arith.mulf %23, %22 : vector<8x128xf32>
    %25 = arith.addf %20, %24 : vector<8x128xf32>
    %26 = arith.truncf %25 : vector<8x128xf32> to vector<8x128xbf16>
    %c0_16 = arith.constant 0 : index
    %c0_17 = arith.constant 0 : index
    %27 = vector.load %arg6[%c0_16, %c0_17] : memref<128x128xbf16, #tpu.memory_space<vmem>>, vector<128x128xbf16>
    %cst_18 = arith.constant dense<0.000000e+00> : vector<8x128xf32>
    %28 = tpu.matmul %26, %27, %cst_18 {dimension_numbers = #tpu.dot_dimension_numbers<[1], [0], [0], [1], [0, 0, 1, 1], [], []>} : vector<8x128xbf16>, vector<128x128xbf16>, vector<8x128xf32> -> vector<8x128xf32>
    %c0_19 = arith.constant 0 : index
    %c0_20 = arith.constant 0 : index
    %29 = vector.load %arg7[%c0_19, %c0_20] : memref<1x128xf32, #tpu.memory_space<vmem>>, vector<1x128xf32>
    %30 = vector.broadcast %29 : vector<1x128xf32> to vector<8x128xf32>
    %31 = arith.addf %28, %30 : vector<8x128xf32>
    %cst_21 = arith.constant 0.000000e+00 : f32
    %32 = vector.broadcast %cst_21 : f32 to vector<8x128xf32>
    %33 = arith.maximumf %31, %32 : vector<8x128xf32>
    %cst_22 = arith.constant 0.000000e+00 : f32
    %34 = vector.broadcast %cst_22 : f32 to vector<8x128xf32>
    %35 = arith.minimumf %31, %34 : vector<8x128xf32>
    %cst_23 = arith.constant 0.00999999977 : f32
    %36 = vector.broadcast %cst_23 : f32 to vector<8x128xf32>
    %37 = arith.mulf %36, %35 : vector<8x128xf32>
    %38 = arith.addf %33, %37 : vector<8x128xf32>
    %c0_24 = arith.constant 0 : index
    %c0_25 = arith.constant 0 : index
    %39 = vector.load %arg8[%c0_24, %c0_25] : memref<8x128xf32, #tpu.memory_space<vmem>>, vector<8x128xf32>
    tpu.vector_store %arg8[%c0_24, %c0_25], %38 {strides = array<i32>} : memref<8x128xf32, #tpu.memory_space<vmem>>, vector<8x128xf32>,
    return
  }
  func.func @transform_0(%arg0: i32) -> (i32, i32) {
    %c0_i32 = arith.constant 0 : i32
    %c0_i32_0 = arith.constant 0 : i32
    return %arg0, %c0_i32 : i32, i32
  }
  func.func @transform_1(%arg0: i32) -> (i32, i32) {
    %c0_i32 = arith.constant 0 : i32
    %c0_i32_0 = arith.constant 0 : i32
    %c0_i32_1 = arith.constant 0 : i32
    return %c0_i32, %c0_i32_0 : i32, i32
  }
  func.func @transform_2(%arg0: i32) -> (i32, i32) {
    %c0_i32 = arith.constant 0 : i32
    %c0_i32_0 = arith.constant 0 : i32
    %c0_i32_1 = arith.constant 0 : i32
    return %c0_i32, %c0_i32_0 : i32, i32
  }
  func.func @transform_3(%arg0: i32) -> (i32, i32) {
    %c0_i32 = arith.constant 0 : i32
    %c0_i32_0 = arith.constant 0 : i32
    %c0_i32_1 = arith.constant 0 : i32
    return %c0_i32, %c0_i32_0 : i32, i32
  }
  func.func @transform_4(%arg0: i32) -> (i32, i32) {
    %c0_i32 = arith.constant 0 : i32
    %c0_i32_0 = arith.constant 0 : i32
    %c0_i32_1 = arith.constant 0 : i32
    return %c0_i32, %c0_i32_0 : i32, i32
  }
  func.func @transform_5(%arg0: i32) -> (i32, i32) {
    %c0_i32 = arith.constant 0 : i32
    %c0_i32_0 = arith.constant 0 : i32
    %c0_i32_1 = arith.constant 0 : i32
    return %c0_i32, %c0_i32_0 : i32, i32
  }
  func.func @transform_6(%arg0: i32) -> (i32, i32) {
    %c0_i32 = arith.constant 0 : i32
    %c0_i32_0 = arith.constant 0 : i32
    %c0_i32_1 = arith.constant 0 : i32
    return %c0_i32, %c0_i32_0 : i32, i32
  }
  func.func @transform_7(%arg0: i32) -> (i32, i32) {
    %c0_i32 = arith.constant 0 : i32
    %c0_i32_0 = arith.constant 0 : i32
    return %arg0, %c0_i32 : i32, i32
  }
}

</mosaic_0001>

<llo_original>
// kernel: tpu_custom_call.1
$region0: #{tpu_custom_call.1}
  #allocation0 [shape = 'u32[]', space=smem, size = 0x4, offset = 0x4, fixed_abs, tag = 'smem constant byte address 0x4 - core index']
  #allocation1 [shape = 'u32[144,128]{1,0:T(1,128)}', space=vmem, size = 0x12000, scoped, tag = 'internal scratch']
  %s0 = inlined_call_operand.hbm [shape: bf16[8,128], index: 0, kind: input, shape index: {}]
  %s1 = inlined_call_operand.hbm [shape: bf16[128,128], index: 1, kind: input, shape index: {}]
  %s2 = inlined_call_operand.vmem [shape: f32[1,128], index: 2, kind: input, shape index: {}]
  %s3 = inlined_call_operand.hbm [shape: bf16[128,128], index: 3, kind: input, shape index: {}]
  %s4 = inlined_call_operand.vmem [shape: f32[1,128], index: 4, kind: input, shape index: {}]
  %s5 = inlined_call_operand.hbm [shape: bf16[128,128], index: 5, kind: input, shape index: {}]
  %s6 = inlined_call_operand.vmem [shape: f32[1,128], index: 6, kind: input, shape index: {}]
  %s7 = inlined_call_operand.hbm [shape: f32[8,128], index: 7, kind: output, shape index: {}]
  %s8 = sld [smem:[#allocation0]]
  $region54: #{tpu_custom_call.1} parent=0
    _
  %s10 = ssub.s32 1, %s8
  %s11 = scalar_select 0, %s10, %s8
  $region1: #{tpu_custom_call.1} parent=0
    #allocation2 [shape = 'u8[2048]{0}', space=vmem, size = 0x800, scoped, tag = 'input window, operand 0, single buffered']
    #allocation3 [shape = 's32[1]{0}', space=sflag, size = 0x4, scoped, tag = 'scoped memory for tpu_custom_call.1']
    #allocation4 [shape = 's32[1]{0}', space=sflag, size = 0x4, scoped, tag = 'scoped memory for tpu_custom_call.1']
    #allocation5 [shape = 'u8[32768]{0}', space=vmem, size = 0x8000, scoped, tag = 'input window, operand 1, single buffered']
    #allocation6 [shape = 's32[1]{0}', space=sflag, size = 0x4, scoped, tag = 'scoped memory for tpu_custom_call.1']
    #allocation7 [shape = 'u8[32768]{0}', space=vmem, size = 0x8000, scoped, tag = 'input window, operand 3, single buffered']
    #allocation8 [shape = 'u8[32768]{0}', space=vmem, size = 0x8000, scoped, tag = 'input window, operand 5, single buffered']
    #allocation9 [shape = 's32[1]{0}', space=sflag, size = 0x4, scoped, tag = 'scoped memory for tpu_custom_call.1']
    #allocation10 [shape = 'u8[4096]{0}', space=vmem, size = 0x1000, scoped, tag = 'output window, operand 0, single buffered']
    %12 = vsyncpa [#allocation3], 0
    %13 = vsyncpa [#allocation6], 0
    %14 = vsyncpa [#allocation9], 0
    %15 = vsyncpa [#allocation4], 0
    // Predicated region
    $region2: #{tpu_custom_call.1} parent=1 // pred_check
      _
    $region3: #{tpu_custom_call.1} parent=1 // pred_check_branch
      %17 = sbr.rel (0) target = $region5
    $region4: #{tpu_custom_call.1} parent=1 // pred_region
      %s19 = ssub.s32 64, 64
      %20 = vsyncadd [#allocation3], %s19
      %s22 = sshll.u32 [#allocation2], 4
      %s23 = int_to_ptr.vmem [resolvable:$true] %s22
      %25 = dma.hbm_to_vmem [thread:$0]  %s0, 64, %s23, [#allocation3]
    $region5: #{tpu_custom_call.1} parent=1 // pred_fallthru
      _
    // Predicated region
    $region6: #{tpu_custom_call.1} parent=1 // pred_check
      _
    $region7: #{tpu_custom_call.1} parent=1 // pred_check_branch
      %27 = sbr.rel (0) target = $region9
    $region8: #{tpu_custom_call.1} parent=1 // pred_region
      %s29 = ssub.s32 1024, 1024
      %30 = vsyncadd [#allocation6], %s29
      %s31 = sshll.u32 [#allocation5], 4
      %s32 = int_to_ptr.vmem [resolvable:$true] %s31
      %37 = dma.hbm_to_vmem [thread:$0]  %s1, 1024, %s32, [#allocation6], 64, 64, 4
    $region9: #{tpu_custom_call.1} parent=1 // pred_fallthru
      _
    // Predicated region
    $region10: #{tpu_custom_call.1} parent=1 // pred_check
      _
    $region11: #{tpu_custom_call.1} parent=1 // pred_check_branch
      %39 = sbr.rel (0) target = $region13
    $region12: #{tpu_custom_call.1} parent=1 // pred_region
      _
    $region13: #{tpu_custom_call.1} parent=1 // pred_fallthru
      _
    // Predicated region
    $region14: #{tpu_custom_call.1} parent=1 // pred_check
      _
    $region15: #{tpu_custom_call.1} parent=1 // pred_check_branch
      %41 = sbr.rel (0) target = $region17
    $region16: #{tpu_custom_call.1} parent=1 // pred_region
      %s43 = ssub.s32 1024, 1024
      %44 = vsyncadd [#allocation6], %s43
      %s45 = sshll.u32 [#allocation7], 4
      %s46 = int_to_ptr.vmem [resolvable:$true] %s45
      %51 = dma.hbm_to_vmem [thread:$0]  %s3, 1024, %s46, [#allocation6], 64, 64, 4
    $region17: #{tpu_custom_call.1} parent=1 // pred_fallthru
      _
    // Predicated region
    $region18: #{tpu_custom_call.1} parent=1 // pred_check
      _
    $region19: #{tpu_custom_call.1} parent=1 // pred_check_branch
      %53 = sbr.rel (0) target = $region21
    $region20: #{tpu_custom_call.1} parent=1 // pred_region
      _
    $region21: #{tpu_custom_call.1} parent=1 // pred_fallthru
      _
    // Predicated region
    $region22: #{tpu_custom_call.1} parent=1 // pred_check
      _
    $region23: #{tpu_custom_call.1} parent=1 // pred_check_branch
      %55 = sbr.rel (0) target = $region25
    $region24: #{tpu_custom_call.1} parent=1 // pred_region
      %s57 = ssub.s32 1024, 1024
      %58 = vsyncadd [#allocation9], %s57
      %s59 = sshll.u32 [#allocation8], 4
      %s60 = int_to_ptr.vmem [resolvable:$true] %s59
      %65 = dma.hbm_to_vmem [thread:$0]  %s5, 1024, %s60, [#allocation9], 64, 64, 4
    $region25: #{tpu_custom_call.1} parent=1 // pred_fallthru
      _
    // Predicated region
    $region26: #{tpu_custom_call.1} parent=1 // pred_check
      _
    $region27: #{tpu_custom_call.1} parent=1 // pred_check_branch
      %67 = sbr.rel (0) target = $region29
    $region28: #{tpu_custom_call.1} parent=1 // pred_region
      _
    $region29: #{tpu_custom_call.1} parent=1 // pred_fallthru
      _
    // Predicated region
    $region30: #{tpu_custom_call.1} parent=1 // pred_check
      _
    $region31: #{tpu_custom_call.1} parent=1 // pred_check_branch
      %69 = sbr.rel (0) target = $region33
    $region32: #{tpu_custom_call.1} parent=1 // pred_region
      %70 = dma.done [#allocation3], 64
    $region33: #{tpu_custom_call.1} parent=1 // pred_fallthru
      _
    // Predicated region
    $region34: #{tpu_custom_call.1} parent=1 // pred_check
      _
    $region35: #{tpu_custom_call.1} parent=1 // pred_check_branch
      %72 = sbr.rel (0) target = $region37
    $region36: #{tpu_custom_call.1} parent=1 // pred_region
      %73 = dma.done [#allocation6], 1024
    $region37: #{tpu_custom_call.1} parent=1 // pred_fallthru
      _
    // Predicated region
    $region38: #{tpu_custom_call.1} parent=1 // pred_check
      _
    $region39: #{tpu_custom_call.1} parent=1 // pred_check_branch
      %75 = sbr.rel (0) target = $region41
    $region40: #{tpu_custom_call.1} parent=1 // pred_region
      %76 = dma.done [#allocation6], 1024
    $region41: #{tpu_custom_call.1} parent=1 // pred_fallthru
      _
    // Predicated region
    $region42: #{tpu_custom_call.1} parent=1 // pred_check
      _
    $region43: #{tpu_custom_call.1} parent=1 // pred_check_branch
      %78 = sbr.rel (0) target = $region45
    $region44: #{tpu_custom_call.1} parent=1 // pred_region
      %79 = dma.done [#allocation9], 1024
    $region45: #{tpu_custom_call.1} parent=1 // pred_fallthru
      _
    %v81 = vld [vmem:[#allocation2] sm:$0xf]
    %v82 = vld [vmem:[#allocation5] sm:$0xf]
    %v83 = vld [vmem:[#allocation5 + $0x4] sm:$0xf]
    %v84 = vld [vmem:[#allocation5 + $0x8] sm:$0xf]
    %v85 = vld [vmem:[#allocation5 + $0xc] sm:$0xf]
    %v86 = vld [vmem:[#allocation5 + $0x10] sm:$0xf]
    %v87 = vld [vmem:[#allocation5 + $0x14] sm:$0xf]
    %v88 = vld [vmem:[#allocation5 + $0x18] sm:$0xf]
    %v89 = vld [vmem:[#allocation5 + $0x1c] sm:$0xf]
    %v90 = vld [vmem:[#allocation5 + $0x20] sm:$0xf]
    %v91 = vld [vmem:[#allocation5 + $0x24] sm:$0xf]
    %v92 = vld [vmem:[#allocation5 + $0x28] sm:$0xf]
    %v93 = vld [vmem:[#allocation5 + $0x2c] sm:$0xf]
    %v94 = vld [vmem:[#allocation5 + $0x30] sm:$0xf]
    %v95 = vld [vmem:[#allocation5 + $0x34] sm:$0xf]
    %v96 = vld [vmem:[#allocation5 + $0x38] sm:$0xf]
    %v97 = vld [vmem:[#allocation5 + $0x3c] sm:$0xf]
    %v98 = vld [vmem:[%s2] sm:$0x1]
    %v100 = vlaneseq
    %v101 = vshrl.u32 %v100, 7
    %v102 = vsub.s32 0, %v101
    %v103 = vrot.slane %v98, %v102
    %v121 = vunpack.c.l.b16 %v82
    %v122 = vunpack.c.l.b16 %v83
    %v123 = vunpack.c.l.b16 %v84
    %v124 = vunpack.c.l.b16 %v85
    %v125 = vunpack.c.l.b16 %v86
    %v126 = vunpack.c.l.b16 %v87
    %v127 = vunpack.c.l.b16 %v88
    %v128 = vunpack.c.l.b16 %v89
    %v129 = vunpack.c.l.b16 %v90
    %v130 = vunpack.c.l.b16 %v91
    %v131 = vunpack.c.l.b16 %v92
    %v132 = vunpack.c.l.b16 %v93
    %v133 = vunpack.c.l.b16 %v94
    %v134 = vunpack.c.l.b16 %v95
    %v135 = vunpack.c.l.b16 %v96
    %v136 = vunpack.c.l.b16 %v97
    %v137 = vpack.c.b16 %v122, %v121
    %v138 = vpack.c.b16 %v124, %v123
    %v139 = vpack.c.b16 %v126, %v125
    %v140 = vpack.c.b16 %v128, %v127
    %v141 = vpack.c.b16 %v130, %v129
    %v142 = vpack.c.b16 %v132, %v131
    %v143 = vpack.c.b16 %v134, %v133
    %v144 = vpack.c.b16 %v136, %v135
    %153 = vmatprep.subr.bf16.mxu0 0
    %154 = vmatpush1.bf16.msra.mxu0 %v137
    %155 = vmatprep.subr.bf16.mxu0 0
    %156 = vmatpush1.bf16.msra.mxu0 %v138
    %157 = vmatprep.subr.bf16.mxu0 0
    %158 = vmatpush1.bf16.msra.mxu0 %v139
    %159 = vmatprep.subr.bf16.mxu0 0
    %160 = vmatpush1.bf16.msra.mxu0 %v140
    %161 = vmatprep.subr.bf16.mxu0 0
    %162 = vmatpush1.bf16.msra.mxu0 %v141
    %163 = vmatprep.subr.bf16.mxu0 0
    %164 = vmatpush1.bf16.msra.mxu0 %v142
    %165 = vmatprep.subr.bf16.mxu0 0
    %166 = vmatpush1.bf16.msra.mxu0 %v143
    %167 = vmatprep.subr.bf16.mxu0 0
    %168 = vmatpush1.bf16.msra.mxu0 %v144
    %169 = vmatprep.subr.bf16.mxu0 0
    %170 = vmatpush1.bf16.msra.mxu0 0
    %171 = vmatprep.subr.bf16.mxu0 0
    %172 = vmatpush1.bf16.msra.mxu0 0
    %173 = vmatprep.subr.bf16.mxu0 0
    %174 = vmatpush1.bf16.msra.mxu0 0
    %175 = vmatprep.subr.bf16.mxu0 0
    %176 = vmatpush1.bf16.msra.mxu0 0
    %177 = vmatprep.subr.bf16.mxu0 0
    %178 = vmatpush1.bf16.msra.mxu0 0
    %179 = vmatprep.subr.bf16.mxu0 0
    %180 = vmatpush1.bf16.msra.mxu0 0
    %181 = vmatprep.subr.bf16.mxu0 0
    %182 = vmatpush1.bf16.msra.mxu0 0
    %183 = vmatprep.subr.bf16.mxu0 0
    %184 = vmatpush1.bf16.msra.mxu0 0
    %185 = vmatprep.mubr.bf16.mxu0 0
    %186 = vmatmul.mubr.bf16.gmra.mrb[0].mxu0 %v81
    %v187 = vpop.f32.mrb[0].mxu0
    %v188 = vadd.f32 %v103, %v187
    %v189 = vpop.f32.mrb[0].mxu0
    %v190 = vpop.f32.mrb[0].mxu0
    %v191 = vpop.f32.mrb[0].mxu0
    %192 = vdwg.mxu0
    %v193 = vmax.f32 %v188, 0.0
    %v194 = vmin.f32 %v188, 0.0
    %v195 = vmul.f32 %v194, 0.01
    %v196 = vadd.f32 %v193, %v195
    %v197 = vpack.c.bf16 %v196, %v196
    %v198 = vld [vmem:[#allocation7] sm:$0xf]
    %v199 = vld [vmem:[#allocation7 + $0x4] sm:$0xf]
    %v200 = vld [vmem:[#allocation7 + $0x8] sm:$0xf]
    %v201 = vld [vmem:[#allocation7 + $0xc] sm:$0xf]
    %v202 = vld [vmem:[#allocation7 + $0x10] sm:$0xf]
    %v203 = vld [vmem:[#allocation7 + $0x14] sm:$0xf]
    %v204 = vld [vmem:[#allocation7 + $0x18] sm:$0xf]
    %v205 = vld [vmem:[#allocation7 + $0x1c] sm:$0xf]
    %v206 = vld [vmem:[#allocation7 + $0x20] sm:$0xf]
    %v207 = vld [vmem:[#allocation7 + $0x24] sm:$0xf]
    %v208 = vld [vmem:[#allocation7 + $0x28] sm:$0xf]
    %v209 = vld [vmem:[#allocation7 + $0x2c] sm:$0xf]
    %v210 = vld [vmem:[#allocation7 + $0x30] sm:$0xf]
    %v211 = vld [vmem:[#allocation7 + $0x34] sm:$0xf]
    %v212 = vld [vmem:[#allocation7 + $0x38] sm:$0xf]
    %v213 = vld [vmem:[#allocation7 + $0x3c] sm:$0xf]
    %v214 = vld [vmem:[%s4] sm:$0x1]
    %v216 = vlaneseq
    %v217 = vshrl.u32 %v216, 7
    %v218 = vsub.s32 0, %v217
    %v219 = vrot.slane %v214, %v218
    %v237 = vunpack.c.l.b16 %v198
    %v238 = vunpack.c.l.b16 %v199
    %v239 = vunpack.c.l.b16 %v200
    %v240 = vunpack.c.l.b16 %v201
    %v241 = vunpack.c.l.b16 %v202
    %v242 = vunpack.c.l.b16 %v203
    %v243 = vunpack.c.l.b16 %v204
    %v244 = vunpack.c.l.b16 %v205
    %v245 = vunpack.c.l.b16 %v206
    %v246 = vunpack.c.l.b16 %v207
    %v247 = vunpack.c.l.b16 %v208
    %v248 = vunpack.c.l.b16 %v209
    %v249 = vunpack.c.l.b16 %v210
    %v250 = vunpack.c.l.b16 %v211
    %v251 = vunpack.c.l.b16 %v212
    %v252 = vunpack.c.l.b16 %v213
    %v253 = vpack.c.b16 %v238, %v237
    %v254 = vpack.c.b16 %v240, %v239
    %v255 = vpack.c.b16 %v242, %v241
    %v256 = vpack.c.b16 %v244, %v243
    %v257 = vpack.c.b16 %v246, %v245
    %v258 = vpack.c.b16 %v248, %v247
    %v259 = vpack.c.b16 %v250, %v249
    %v260 = vpack.c.b16 %v252, %v251
    %269 = vmatprep.subr.bf16.mxu0 0
    %270 = vmatpush1.bf16.msra.mxu0 %v253
    %271 = vmatprep.subr.bf16.mxu0 0
    %272 = vmatpush1.bf16.msra.mxu0 %v254
    %273 = vmatprep.subr.bf16.mxu0 0
    %274 = vmatpush1.bf16.msra.mxu0 %v255
    %275 = vmatprep.subr.bf16.mxu0 0
    %276 = vmatpush1.bf16.msra.mxu0 %v256
    %277 = vmatprep.subr.bf16.mxu0 0
    %278 = vmatpush1.bf16.msra.mxu0 %v257
    %279 = vmatprep.subr.bf16.mxu0 0
    %280 = vmatpush1.bf16.msra.mxu0 %v258
    %281 = vmatprep.subr.bf16.mxu0 0
    %282 = vmatpush1.bf16.msra.mxu0 %v259
    %283 = vmatprep.subr.bf16.mxu0 0
    %284 = vmatpush1.bf16.msra.mxu0 %v260
    %285 = vmatprep.subr.bf16.mxu0 0
    %286 = vmatpush1.bf16.msra.mxu0 0
    %287 = vmatprep.subr.bf16.mxu0 0
    %288 = vmatpush1.bf16.msra.mxu0 0
    %289 = vmatprep.subr.bf16.mxu0 0
    %290 = vmatpush1.bf16.msra.mxu0 0
    %291 = vmatprep.subr.bf16.mxu0 0
    %292 = vmatpush1.bf16.msra.mxu0 0
    %293 = vmatprep.subr.bf16.mxu0 0
    %294 = vmatpush1.bf16.msra.mxu0 0
    %295 = vmatprep.subr.bf16.mxu0 0
    %296 = vmatpush1.bf16.msra.mxu0 0
    %297 = vmatprep.subr.bf16.mxu0 0
    %298 = vmatpush1.bf16.msra.mxu0 0
    %299 = vmatprep.subr.bf16.mxu0 0
    %300 = vmatpush1.bf16.msra.mxu0 0
    %301 = vmatprep.mubr.bf16.mxu0 0
    %302 = vmatmul.mubr.bf16.gmra.mrb[0].mxu0 %v197
    %v303 = vpop.f32.mrb[0].mxu0
    %v304 = vadd.f32 %v219, %v303
    %v305 = vpop.f32.mrb[0].mxu0
    %v306 = vpop.f32.mrb[0].mxu0
    %v307 = vpop.f32.mrb[0].mxu0
    %308 = vdwg.mxu0
    %v309 = vmax.f32 %v304, 0.0
    %v310 = vmin.f32 %v304, 0.0
    %v311 = vmul.f32 %v310, 0.01
    %v312 = vadd.f32 %v309, %v311
    %v313 = vpack.c.bf16 %v312, %v312
    %v314 = vld [vmem:[#allocation8] sm:$0xf]
    %v315 = vld [vmem:[#allocation8 + $0x4] sm:$0xf]
    %v316 = vld [vmem:[#allocation8 + $0x8] sm:$0xf]
    %v317 = vld [vmem:[#allocation8 + $0xc] sm:$0xf]
    %v318 = vld [vmem:[#allocation8 + $0x10] sm:$0xf]
    %v319 = vld [vmem:[#allocation8 + $0x14] sm:$0xf]
    %v320 = vld [vmem:[#allocation8 + $0x18] sm:$0xf]
    %v321 = vld [vmem:[#allocation8 + $0x1c] sm:$0xf]
    %v322 = vld [vmem:[#allocation8 + $0x20] sm:$0xf]
    %v323 = vld [vmem:[#allocation8 + $0x24] sm:$0xf]
    %v324 = vld [vmem:[#allocation8 + $0x28] sm:$0xf]
    %v325 = vld [vmem:[#allocation8 + $0x2c] sm:$0xf]
    %v326 = vld [vmem:[#allocation8 + $0x30] sm:$0xf]
    %v327 = vld [vmem:[#allocation8 + $0x34] sm:$0xf]
    %v328 = vld [vmem:[#allocation8 + $0x38] sm:$0xf]
    %v329 = vld [vmem:[#allocation8 + $0x3c] sm:$0xf]
    %v330 = vld [vmem:[%s6] sm:$0x1]
    %v332 = vlaneseq
    %v333 = vshrl.u32 %v332, 7
    %v334 = vsub.s32 0, %v333
    %v335 = vrot.slane %v330, %v334
    %v353 = vunpack.c.l.b16 %v314
    %v354 = vunpack.c.l.b16 %v315
    %v355 = vunpack.c.l.b16 %v316
    %v356 = vunpack.c.l.b16 %v317
    %v357 = vunpack.c.l.b16 %v318
    %v358 = vunpack.c.l.b16 %v319
    %v359 = vunpack.c.l.b16 %v320
    %v360 = vunpack.c.l.b16 %v321
    %v361 = vunpack.c.l.b16 %v322
    %v362 = vunpack.c.l.b16 %v323
    %v363 = vunpack.c.l.b16 %v324
    %v364 = vunpack.c.l.b16 %v325
    %v365 = vunpack.c.l.b16 %v326
    %v366 = vunpack.c.l.b16 %v327
    %v367 = vunpack.c.l.b16 %v328
    %v368 = vunpack.c.l.b16 %v329
    %v369 = vpack.c.b16 %v354, %v353
    %v370 = vpack.c.b16 %v356, %v355
    %v371 = vpack.c.b16 %v358, %v357
    %v372 = vpack.c.b16 %v360, %v359
    %v373 = vpack.c.b16 %v362, %v361
    %v374 = vpack.c.b16 %v364, %v363
    %v375 = vpack.c.b16 %v366, %v365
    %v376 = vpack.c.b16 %v368, %v367
    %385 = vmatprep.subr.bf16.mxu0 0
    %386 = vmatpush1.bf16.msra.mxu0 %v369
    %387 = vmatprep.subr.bf16.mxu0 0
    %388 = vmatpush1.bf16.msra.mxu0 %v370
    %389 = vmatprep.subr.bf16.mxu0 0
    %390 = vmatpush1.bf16.msra.mxu0 %v371
    %391 = vmatprep.subr.bf16.mxu0 0
    %392 = vmatpush1.bf16.msra.mxu0 %v372
    %393 = vmatprep.subr.bf16.mxu0 0
    %394 = vmatpush1.bf16.msra.mxu0 %v373
    %395 = vmatprep.subr.bf16.mxu0 0
    %396 = vmatpush1.bf16.msra.mxu0 %v374
    %397 = vmatprep.subr.bf16.mxu0 0
    %398 = vmatpush1.bf16.msra.mxu0 %v375
    %399 = vmatprep.subr.bf16.mxu0 0
    %400 = vmatpush1.bf16.msra.mxu0 %v376
    %401 = vmatprep.subr.bf16.mxu0 0
    %402 = vmatpush1.bf16.msra.mxu0 0
    %403 = vmatprep.subr.bf16.mxu0 0
    %404 = vmatpush1.bf16.msra.mxu0 0
    %405 = vmatprep.subr.bf16.mxu0 0
    %406 = vmatpush1.bf16.msra.mxu0 0
    %407 = vmatprep.subr.bf16.mxu0 0
    %408 = vmatpush1.bf16.msra.mxu0 0
    %409 = vmatprep.subr.bf16.mxu0 0
    %410 = vmatpush1.bf16.msra.mxu0 0
    %411 = vmatprep.subr.bf16.mxu0 0
    %412 = vmatpush1.bf16.msra.mxu0 0
    %413 = vmatprep.subr.bf16.mxu0 0
    %414 = vmatpush1.bf16.msra.mxu0 0
    %415 = vmatprep.subr.bf16.mxu0 0
    %416 = vmatpush1.bf16.msra.mxu0 0
    %417 = vmatprep.mubr.bf16.mxu0 0
    %418 = vmatmul.mubr.bf16.gmra.mrb[0].mxu0 %v313
    %v419 = vpop.f32.mrb[0].mxu0
    %v420 = vadd.f32 %v335, %v419
    %v421 = vpop.f32.mrb[0].mxu0
    %v422 = vpop.f32.mrb[0].mxu0
    %v423 = vpop.f32.mrb[0].mxu0
    %424 = vdwg.mxu0
    %v425 = vmax.f32 %v420, 0.0
    %v426 = vmin.f32 %v420, 0.0
    %v427 = vmul.f32 %v426, 0.01
    %v428 = vadd.f32 %v425, %v427
    %429 = vst [vmem:[#allocation10] sm:$0xff] %v428
    // Predicated region
    $region46: #{tpu_custom_call.1} parent=1 // pred_check
      _
    $region47: #{tpu_custom_call.1} parent=1 // pred_check_branch
      %431 = sbr.rel (0) target = $region49
    $region48: #{tpu_custom_call.1} parent=1 // pred_region
      %s433 = ssub.s32 128, 128
      %434 = vsyncadd [#allocation4], %s433
      %s436 = sshll.u32 [#allocation10], 4
      %s437 = int_to_ptr.vmem [resolvable:$true] %s436
      %439 = dma.vmem_to_hbm [thread:$0]  %s437, 128, %s7, [#allocation4]
    $region49: #{tpu_custom_call.1} parent=1 // pred_fallthru
      _
    // Predicated region
    $region50: #{tpu_custom_call.1} parent=1 // pred_check
      _
    $region51: #{tpu_custom_call.1} parent=1 // pred_check_branch
      %441 = sbr.rel (0) target = $region53
    $region52: #{tpu_custom_call.1} parent=1 // pred_region
      %442 = dma.done [#allocation4], 128
    $region53: #{tpu_custom_call.1} parent=1 // pred_fallthru
      _
    %443 = vsyncpa [#allocation3], 1
    %444 = vsyncpa [#allocation6], 1
    %445 = vsyncpa [#allocation9], 1
    %446 = vsyncpa [#allocation4], 1

// kernel: tpu_custom_call.1
$region0: #{tpu_custom_call.1}
  #allocation0 [shape = 'u32[]', space=smem, size = 0x4, offset = 0x4, fixed_abs, tag = 'smem constant byte address 0x4 - core index']
  #allocation1 [shape = 'u32[144,128]{1,0:T(1,128)}', space=vmem, size = 0x12000, scoped, tag = 'internal scratch']
  %s0 = inlined_call_operand.hbm [shape: bf16[8,128], index: 0, kind: input, shape index: {}]
  %s1 = inlined_call_operand.hbm [shape: bf16[128,128], index: 1, kind: input, shape index: {}]
  %s2 = inlined_call_operand.vmem [shape: f32[1,128], index: 2, kind: input, shape index: {}]
  %s3 = inlined_call_operand.hbm [shape: bf16[128,128], index: 3, kind: input, shape index: {}]
  %s4 = inlined_call_operand.vmem [shape: f32[1,128], index: 4, kind: input, shape index: {}]
  %s5 = inlined_call_operand.hbm [shape: bf16[128,128], index: 5, kind: input, shape index: {}]
  %s6 = inlined_call_operand.vmem [shape: f32[1,128], index: 6, kind: input, shape index: {}]
  %s7 = inlined_call_operand.hbm [shape: f32[8,128], index: 7, kind: output, shape index: {}]
  %s8 = sld [smem:[#allocation0]]
  $region54: #{tpu_custom_call.1} parent=0
    _
  %s10 = ssub.s32 1, %s8
  %s11 = scalar_select 0, %s10, %s8
  $region1: #{tpu_custom_call.1} parent=0
    #allocation2 [shape = 'u8[2048]{0}', space=vmem, size = 0x800, scoped, tag = 'input window, operand 0, single buffered']
    #allocation3 [shape = 's32[1]{0}', space=sflag, size = 0x4, scoped, tag = 'scoped memory for tpu_custom_call.1']
    #allocation4 [shape = 's32[1]{0}', space=sflag, size = 0x4, scoped, tag = 'scoped memory for tpu_custom_call.1']
    #allocation5 [shape = 'u8[32768]{0}', space=vmem, size = 0x8000, scoped, tag = 'input window, operand 1, single buffered']
    #allocation6 [shape = 's32[1]{0}', space=sflag, size = 0x4, scoped, tag = 'scoped memory for tpu_custom_call.1']
    #allocation7 [shape = 'u8[32768]{0}', space=vmem, size = 0x8000, scoped, tag = 'input window, operand 3, single buffered']
    #allocation8 [shape = 'u8[32768]{0}', space=vmem, size = 0x8000, scoped, tag = 'input window, operand 5, single buffered']
    #allocation9 [shape = 's32[1]{0}', space=sflag, size = 0x4, scoped, tag = 'scoped memory for tpu_custom_call.1']
    #allocation10 [shape = 'u8[4096]{0}', space=vmem, size = 0x1000, scoped, tag = 'output window, operand 0, single buffered']
    %12 = vsyncpa [#allocation3], 0
    %13 = vsyncpa [#allocation6], 0
    %14 = vsyncpa [#allocation9], 0
    %15 = vsyncpa [#allocation4], 0
    // Predicated region
    $region2: #{tpu_custom_call.1} parent=1 // pred_check
      _
    $region3: #{tpu_custom_call.1} parent=1 // pred_check_branch
      %17 = sbr.rel (0) target = $region5
    $region4: #{tpu_custom_call.1} parent=1 // pred_region
      %s19 = ssub.s32 64, 64
      %20 = vsyncadd [#allocation3], %s19
      %s22 = sshll.u32 [#allocation2], 4
      %s23 = int_to_ptr.vmem [resolvable:$true] %s22
      %25 = dma.hbm_to_vmem [thread:$0]  %s0, 64, %s23, [#allocation3]
    $region5: #{tpu_custom_call.1} parent=1 // pred_fallthru
      _
    // Predicated region
    $region6: #{tpu_custom_call.1} parent=1 // pred_check
      _
    $region7: #{tpu_custom_call.1} parent=1 // pred_check_branch
      %27 = sbr.rel (0) target = $region9
    $region8: #{tpu_custom_call.1} parent=1 // pred_region
      %s29 = ssub.s32 1024, 1024
      %30 = vsyncadd [#allocation6], %s29
      %s31 = sshll.u32 [#allocation5], 4
      %s32 = int_to_ptr.vmem [resolvable:$true] %s31
      %37 = dma.hbm_to_vmem [thread:$0]  %s1, 1024, %s32, [#allocation6], 64, 64, 4
    $region9: #{tpu_custom_call.1} parent=1 // pred_fallthru
      _
    // Predicated region
    $region10: #{tpu_custom_call.1} parent=1 // pred_check
      _
    $region11: #{tpu_custom_call.1} parent=1 // pred_check_branch
      %39 = sbr.rel (0) target = $region13
    $region12: #{tpu_custom_call.1} parent=1 // pred_region
      _
    $region13: #{tpu_custom_call.1} parent=1 // pred_fallthru
      _
    // Predicated region
    $region14: #{tpu_custom_call.1} parent=1 // pred_check
      _
    $region15: #{tpu_custom_call.1} parent=1 // pred_check_branch
      %41 = sbr.rel (0) target = $region17
    $region16: #{tpu_custom_call.1} parent=1 // pred_region
      %s43 = ssub.s32 1024, 1024
      %44 = vsyncadd [#allocation6], %s43
      %s45 = sshll.u32 [#allocation7], 4
      %s46 = int_to_ptr.vmem [resolvable:$true] %s45
      %51 = dma.hbm_to_vmem [thread:$0]  %s3, 1024, %s46, [#allocation6], 64, 64, 4
    $region17: #{tpu_custom_call.1} parent=1 // pred_fallthru
      _
    // Predicated region
    $region18: #{tpu_custom_call.1} parent=1 // pred_check
      _
    $region19: #{tpu_custom_call.1} parent=1 // pred_check_branch
      %53 = sbr.rel (0) target = $region21
    $region20: #{tpu_custom_call.1} parent=1 // pred_region
      _
    $region21: #{tpu_custom_call.1} parent=1 // pred_fallthru
      _
    // Predicated region
    $region22: #{tpu_custom_call.1} parent=1 // pred_check
      _
    $region23: #{tpu_custom_call.1} parent=1 // pred_check_branch
      %55 = sbr.rel (0) target = $region25
    $region24: #{tpu_custom_call.1} parent=1 // pred_region
      %s57 = ssub.s32 1024, 1024
      %58 = vsyncadd [#allocation9], %s57
      %s59 = sshll.u32 [#allocation8], 4
      %s60 = int_to_ptr.vmem [resolvable:$true] %s59
      %65 = dma.hbm_to_vmem [thread:$0]  %s5, 1024, %s60, [#allocation9], 64, 64, 4
    $region25: #{tpu_custom_call.1} parent=1 // pred_fallthru
      _
    // Predicated region
    $region26: #{tpu_custom_call.1} parent=1 // pred_check
      _
    $region27: #{tpu_custom_call.1} parent=1 // pred_check_branch
      %67 = sbr.rel (0) target = $region29
    $region28: #{tpu_custom_call.1} parent=1 // pred_region
      _
    $region29: #{tpu_custom_call.1} parent=1 // pred_fallthru
      _
    // Predicated region
    $region30: #{tpu_custom_call.1} parent=1 // pred_check
      _
    $region31: #{tpu_custom_call.1} parent=1 // pred_check_branch
      %69 = sbr.rel (0) target = $region33
    $region32: #{tpu_custom_call.1} parent=1 // pred_region
      %70 = dma.done [#allocation3], 64
    $region33: #{tpu_custom_call.1} parent=1 // pred_fallthru
      _
    // Predicated region
    $region34: #{tpu_custom_call.1} parent=1 // pred_check
      _
    $region35: #{tpu_custom_call.1} parent=1 // pred_check_branch
      %72 = sbr.rel (0) target = $region37
    $region36: #{tpu_custom_call.1} parent=1 // pred_region
      %73 = dma.done [#allocation6], 1024
    $region37: #{tpu_custom_call.1} parent=1 // pred_fallthru
      _
    // Predicated region
    $region38: #{tpu_custom_call.1} parent=1 // pred_check
      _
    $region39: #{tpu_custom_call.1} parent=1 // pred_check_branch
      %75 = sbr.rel (0) target = $region41
    $region40: #{tpu_custom_call.1} parent=1 // pred_region
      %76 = dma.done [#allocation6], 1024
    $region41: #{tpu_custom_call.1} parent=1 // pred_fallthru
      _
    // Predicated region
    $region42: #{tpu_custom_call.1} parent=1 // pred_check
      _
    $region43: #{tpu_custom_call.1} parent=1 // pred_check_branch
      %78 = sbr.rel (0) target = $region45
    $region44: #{tpu_custom_call.1} parent=1 // pred_region
      %79 = dma.done [#allocation9], 1024
    $region45: #{tpu_custom_call.1} parent=1 // pred_fallthru
      _
    %v81 = vld [vmem:[#allocation2] sm:$0xf]
    %v82 = vld [vmem:[#allocation5] sm:$0xf]
    %v83 = vld [vmem:[#allocation5 + $0x4] sm:$0xf]
    %v84 = vld [vmem:[#allocation5 + $0x8] sm:$0xf]
    %v85 = vld [vmem:[#allocation5 + $0xc] sm:$0xf]
    %v86 = vld [vmem:[#allocation5 + $0x10] sm:$0xf]
    %v87 = vld [vmem:[#allocation5 + $0x14] sm:$0xf]
    %v88 = vld [vmem:[#allocation5 + $0x18] sm:$0xf]
    %v89 = vld [vmem:[#allocation5 + $0x1c] sm:$0xf]
    %v90 = vld [vmem:[#allocation5 + $0x20] sm:$0xf]
    %v91 = vld [vmem:[#allocation5 + $0x24] sm:$0xf]
    %v92 = vld [vmem:[#allocation5 + $0x28] sm:$0xf]
    %v93 = vld [vmem:[#allocation5 + $0x2c] sm:$0xf]
    %v94 = vld [vmem:[#allocation5 + $0x30] sm:$0xf]
    %v95 = vld [vmem:[#allocation5 + $0x34] sm:$0xf]
    %v96 = vld [vmem:[#allocation5 + $0x38] sm:$0xf]
    %v97 = vld [vmem:[#allocation5 + $0x3c] sm:$0xf]
    %v98 = vld [vmem:[%s2] sm:$0x1]
    %v100 = vlaneseq
    %v101 = vshrl.u32 %v100, 7
    %v102 = vsub.s32 0, %v101
    %v103 = vrot.slane %v98, %v102
    %v121 = vunpack.c.l.b16 %v82
    %v122 = vunpack.c.l.b16 %v83
    %v123 = vunpack.c.l.b16 %v84
    %v124 = vunpack.c.l.b16 %v85
    %v125 = vunpack.c.l.b16 %v86
    %v126 = vunpack.c.l.b16 %v87
    %v127 = vunpack.c.l.b16 %v88
    %v128 = vunpack.c.l.b16 %v89
    %v129 = vunpack.c.l.b16 %v90
    %v130 = vunpack.c.l.b16 %v91
    %v131 = vunpack.c.l.b16 %v92
    %v132 = vunpack.c.l.b16 %v93
    %v133 = vunpack.c.l.b16 %v94
    %v134 = vunpack.c.l.b16 %v95
    %v135 = vunpack.c.l.b16 %v96
    %v136 = vunpack.c.l.b16 %v97
    %v137 = vpack.c.b16 %v122, %v121
    %v138 = vpack.c.b16 %v124, %v123
    %v139 = vpack.c.b16 %v126, %v125
    %v140 = vpack.c.b16 %v128, %v127
    %v141 = vpack.c.b16 %v130, %v129
    %v142 = vpack.c.b16 %v132, %v131
    %v143 = vpack.c.b16 %v134, %v133
    %v144 = vpack.c.b16 %v136, %v135
    %153 = vmatprep.subr.bf16.mxu0 0
    %154 = vmatpush1.bf16.msra.mxu0 %v137
    %155 = vmatprep.subr.bf16.mxu0 0
    %156 = vmatpush1.bf16.msra.mxu0 %v138
    %157 = vmatprep.subr.bf16.mxu0 0
    %158 = vmatpush1.bf16.msra.mxu0 %v139
    %159 = vmatprep.subr.bf16.mxu0 0
    %160 = vmatpush1.bf16.msra.mxu0 %v140
    %161 = vmatprep.subr.bf16.mxu0 0
    %162 = vmatpush1.bf16.msra.mxu0 %v141
    %163 = vmatprep.subr.bf16.mxu0 0
    %164 = vmatpush1.bf16.msra.mxu0 %v142
    %165 = vmatprep.subr.bf16.mxu0 0
    %166 = vmatpush1.bf16.msra.mxu0 %v143
    %167 = vmatprep.subr.bf16.mxu0 0
    %168 = vmatpush1.bf16.msra.mxu0 %v144
    %169 = vmatprep.subr.bf16.mxu0 0
    %170 = vmatpush1.bf16.msra.mxu0 0
    %171 = vmatprep.subr.bf16.mxu0 0
    %172 = vmatpush1.bf16.msra.mxu0 0
    %173 = vmatprep.subr.bf16.mxu0 0
    %174 = vmatpush1.bf16.msra.mxu0 0
    %175 = vmatprep.subr.bf16.mxu0 0
    %176 = vmatpush1.bf16.msra.mxu0 0
    %177 = vmatprep.subr.bf16.mxu0 0
    %178 = vmatpush1.bf16.msra.mxu0 0
    %179 = vmatprep.subr.bf16.mxu0 0
    %180 = vmatpush1.bf16.msra.mxu0 0
    %181 = vmatprep.subr.bf16.mxu0 0
    %182 = vmatpush1.bf16.msra.mxu0 0
    %183 = vmatprep.subr.bf16.mxu0 0
    %184 = vmatpush1.bf16.msra.mxu0 0
    %185 = vmatprep.mubr.bf16.mxu0 0
    %186 = vmatmul.mubr.bf16.gmra.mrb[0].mxu0 %v81
    %v187 = vpop.f32.mrb[0].mxu0
    %v188 = vadd.f32 %v103, %v187
    %v189 = vpop.f32.mrb[0].mxu0
    %v190 = vpop.f32.mrb[0].mxu0
    %v191 = vpop.f32.mrb[0].mxu0
    %192 = vdwg.mxu0
    %v193 = vmax.f32 %v188, 0.0
    %v194 = vmin.f32 %v188, 0.0
    %v195 = vmul.f32 %v194, 0.01
    %v196 = vadd.f32 %v193, %v195
    %v197 = vpack.c.bf16 %v196, %v196
    %v198 = vld [vmem:[#allocation7] sm:$0xf]
    %v199 = vld [vmem:[#allocation7 + $0x4] sm:$0xf]
    %v200 = vld [vmem:[#allocation7 + $0x8] sm:$0xf]
    %v201 = vld [vmem:[#allocation7 + $0xc] sm:$0xf]
    %v202 = vld [vmem:[#allocation7 + $0x10] sm:$0xf]
    %v203 = vld [vmem:[#allocation7 + $0x14] sm:$0xf]
    %v204 = vld [vmem:[#allocation7 + $0x18] sm:$0xf]
    %v205 = vld [vmem:[#allocation7 + $0x1c] sm:$0xf]
    %v206 = vld [vmem:[#allocation7 + $0x20] sm:$0xf]
    %v207 = vld [vmem:[#allocation7 + $0x24] sm:$0xf]
    %v208 = vld [vmem:[#allocation7 + $0x28] sm:$0xf]
    %v209 = vld [vmem:[#allocation7 + $0x2c] sm:$0xf]
    %v210 = vld [vmem:[#allocation7 + $0x30] sm:$0xf]
    %v211 = vld [vmem:[#allocation7 + $0x34] sm:$0xf]
    %v212 = vld [vmem:[#allocation7 + $0x38] sm:$0xf]
    %v213 = vld [vmem:[#allocation7 + $0x3c] sm:$0xf]
    %v214 = vld [vmem:[%s4] sm:$0x1]
    %v216 = vlaneseq
    %v217 = vshrl.u32 %v216, 7
    %v218 = vsub.s32 0, %v217
    %v219 = vrot.slane %v214, %v218
    %v237 = vunpack.c.l.b16 %v198
    %v238 = vunpack.c.l.b16 %v199
    %v239 = vunpack.c.l.b16 %v200
    %v240 = vunpack.c.l.b16 %v201
    %v241 = vunpack.c.l.b16 %v202
    %v242 = vunpack.c.l.b16 %v203
    %v243 = vunpack.c.l.b16 %v204
    %v244 = vunpack.c.l.b16 %v205
    %v245 = vunpack.c.l.b16 %v206
    %v246 = vunpack.c.l.b16 %v207
    %v247 = vunpack.c.l.b16 %v208
    %v248 = vunpack.c.l.b16 %v209
    %v249 = vunpack.c.l.b16 %v210
    %v250 = vunpack.c.l.b16 %v211
    %v251 = vunpack.c.l.b16 %v212
    %v252 = vunpack.c.l.b16 %v213
    %v253 = vpack.c.b16 %v238, %v237
    %v254 = vpack.c.b16 %v240, %v239
    %v255 = vpack.c.b16 %v242, %v241
    %v256 = vpack.c.b16 %v244, %v243
    %v257 = vpack.c.b16 %v246, %v245
    %v258 = vpack.c.b16 %v248, %v247
    %v259 = vpack.c.b16 %v250, %v249
    %v260 = vpack.c.b16 %v252, %v251
    %269 = vmatprep.subr.bf16.mxu0 0
    %270 = vmatpush1.bf16.msra.mxu0 %v253
    %271 = vmatprep.subr.bf16.mxu0 0
    %272 = vmatpush1.bf16.msra.mxu0 %v254
    %273 = vmatprep.subr.bf16.mxu0 0
    %274 = vmatpush1.bf16.msra.mxu0 %v255
    %275 = vmatprep.subr.bf16.mxu0 0
    %276 = vmatpush1.bf16.msra.mxu0 %v256
    %277 = vmatprep.subr.bf16.mxu0 0
    %278 = vmatpush1.bf16.msra.mxu0 %v257
    %279 = vmatprep.subr.bf16.mxu0 0
    %280 = vmatpush1.bf16.msra.mxu0 %v258
    %281 = vmatprep.subr.bf16.mxu0 0
    %282 = vmatpush1.bf16.msra.mxu0 %v259
    %283 = vmatprep.subr.bf16.mxu0 0
    %284 = vmatpush1.bf16.msra.mxu0 %v260
    %285 = vmatprep.subr.bf16.mxu0 0
    %286 = vmatpush1.bf16.msra.mxu0 0
    %287 = vmatprep.subr.bf16.mxu0 0
    %288 = vmatpush1.bf16.msra.mxu0 0
    %289 = vmatprep.subr.bf16.mxu0 0
    %290 = vmatpush1.bf16.msra.mxu0 0
    %291 = vmatprep.subr.bf16.mxu0 0
    %292 = vmatpush1.bf16.msra.mxu0 0
    %293 = vmatprep.subr.bf16.mxu0 0
    %294 = vmatpush1.bf16.msra.mxu0 0
    %295 = vmatprep.subr.bf16.mxu0 0
    %296 = vmatpush1.bf16.msra.mxu0 0
    %297 = vmatprep.subr.bf16.mxu0 0
    %298 = vmatpush1.bf16.msra.mxu0 0
    %299 = vmatprep.subr.bf16.mxu0 0
    %300 = vmatpush1.bf16.msra.mxu0 0
    %301 = vmatprep.mubr.bf16.mxu0 0
    %302 = vmatmul.mubr.bf16.gmra.mrb[0].mxu0 %v197
    %v303 = vpop.f32.mrb[0].mxu0
    %v304 = vadd.f32 %v219, %v303
    %v305 = vpop.f32.mrb[0].mxu0
    %v306 = vpop.f32.mrb[0].mxu0
    %v307 = vpop.f32.mrb[0].mxu0
    %308 = vdwg.mxu0
    %v309 = vmax.f32 %v304, 0.0
    %v310 = vmin.f32 %v304, 0.0
    %v311 = vmul.f32 %v310, 0.01
    %v312 = vadd.f32 %v309, %v311
    %v313 = vpack.c.bf16 %v312, %v312
    %v314 = vld [vmem:[#allocation8] sm:$0xf]
    %v315 = vld [vmem:[#allocation8 + $0x4] sm:$0xf]
    %v316 = vld [vmem:[#allocation8 + $0x8] sm:$0xf]
    %v317 = vld [vmem:[#allocation8 + $0xc] sm:$0xf]
    %v318 = vld [vmem:[#allocation8 + $0x10] sm:$0xf]
    %v319 = vld [vmem:[#allocation8 + $0x14] sm:$0xf]
    %v320 = vld [vmem:[#allocation8 + $0x18] sm:$0xf]
    %v321 = vld [vmem:[#allocation8 + $0x1c] sm:$0xf]
    %v322 = vld [vmem:[#allocation8 + $0x20] sm:$0xf]
    %v323 = vld [vmem:[#allocation8 + $0x24] sm:$0xf]
    %v324 = vld [vmem:[#allocation8 + $0x28] sm:$0xf]
    %v325 = vld [vmem:[#allocation8 + $0x2c] sm:$0xf]
    %v326 = vld [vmem:[#allocation8 + $0x30] sm:$0xf]
    %v327 = vld [vmem:[#allocation8 + $0x34] sm:$0xf]
    %v328 = vld [vmem:[#allocation8 + $0x38] sm:$0xf]
    %v329 = vld [vmem:[#allocation8 + $0x3c] sm:$0xf]
    %v330 = vld [vmem:[%s6] sm:$0x1]
    %v332 = vlaneseq
    %v333 = vshrl.u32 %v332, 7
    %v334 = vsub.s32 0, %v333
    %v335 = vrot.slane %v330, %v334
    %v353 = vunpack.c.l.b16 %v314
    %v354 = vunpack.c.l.b16 %v315
    %v355 = vunpack.c.l.b16 %v316
    %v356 = vunpack.c.l.b16 %v317
    %v357 = vunpack.c.l.b16 %v318
    %v358 = vunpack.c.l.b16 %v319
    %v359 = vunpack.c.l.b16 %v320
    %v360 = vunpack.c.l.b16 %v321
    %v361 = vunpack.c.l.b16 %v322
    %v362 = vunpack.c.l.b16 %v323
    %v363 = vunpack.c.l.b16 %v324
    %v364 = vunpack.c.l.b16 %v325
    %v365 = vunpack.c.l.b16 %v326
    %v366 = vunpack.c.l.b16 %v327
    %v367 = vunpack.c.l.b16 %v328
    %v368 = vunpack.c.l.b16 %v329
    %v369 = vpack.c.b16 %v354, %v353
    %v370 = vpack.c.b16 %v356, %v355
    %v371 = vpack.c.b16 %v358, %v357
    %v372 = vpack.c.b16 %v360, %v359
    %v373 = vpack.c.b16 %v362, %v361
    %v374 = vpack.c.b16 %v364, %v363
    %v375 = vpack.c.b16 %v366, %v365
    %v376 = vpack.c.b16 %v368, %v367
    %385 = vmatprep.subr.bf16.mxu0 0
    %386 = vmatpush1.bf16.msra.mxu0 %v369
    %387 = vmatprep.subr.bf16.mxu0 0
    %388 = vmatpush1.bf16.msra.mxu0 %v370
    %389 = vmatprep.subr.bf16.mxu0 0
    %390 = vmatpush1.bf16.msra.mxu0 %v371
    %391 = vmatprep.subr.bf16.mxu0 0
    %392 = vmatpush1.bf16.msra.mxu0 %v372
    %393 = vmatprep.subr.bf16.mxu0 0
    %394 = vmatpush1.bf16.msra.mxu0 %v373
    %395 = vmatprep.subr.bf16.mxu0 0
    %396 = vmatpush1.bf16.msra.mxu0 %v374
    %397 = vmatprep.subr.bf16.mxu0 0
    %398 = vmatpush1.bf16.msra.mxu0 %v375
    %399 = vmatprep.subr.bf16.mxu0 0
    %400 = vmatpush1.bf16.msra.mxu0 %v376
    %401 = vmatprep.subr.bf16.mxu0 0
    %402 = vmatpush1.bf16.msra.mxu0 0
    %403 = vmatprep.subr.bf16.mxu0 0
    %404 = vmatpush1.bf16.msra.mxu0 0
    %405 = vmatprep.subr.bf16.mxu0 0
    %406 = vmatpush1.bf16.msra.mxu0 0
    %407 = vmatprep.subr.bf16.mxu0 0
    %408 = vmatpush1.bf16.msra.mxu0 0
    %409 = vmatprep.subr.bf16.mxu0 0
    %410 = vmatpush1.bf16.msra.mxu0 0
    %411 = vmatprep.subr.bf16.mxu0 0
    %412 = vmatpush1.bf16.msra.mxu0 0
    %413 = vmatprep.subr.bf16.mxu0 0
    %414 = vmatpush1.bf16.msra.mxu0 0
    %415 = vmatprep.subr.bf16.mxu0 0
    %416 = vmatpush1.bf16.msra.mxu0 0
    %417 = vmatprep.mubr.bf16.mxu0 0
    %418 = vmatmul.mubr.bf16.gmra.mrb[0].mxu0 %v313
    %v419 = vpop.f32.mrb[0].mxu0
    %v420 = vadd.f32 %v335, %v419
    %v421 = vpop.f32.mrb[0].mxu0
    %v422 = vpop.f32.mrb[0].mxu0
    %v423 = vpop.f32.mrb[0].mxu0
    %424 = vdwg.mxu0
    %v425 = vmax.f32 %v420, 0.0
    %v426 = vmin.f32 %v420, 0.0
    %v427 = vmul.f32 %v426, 0.01
    %v428 = vadd.f32 %v425, %v427
    %429 = vst [vmem:[#allocation10] sm:$0xff] %v428
    // Predicated region
    $region46: #{tpu_custom_call.1} parent=1 // pred_check
      _
    $region47: #{tpu_custom_call.1} parent=1 // pred_check_branch
      %431 = sbr.rel (0) target = $region49
    $region48: #{tpu_custom_call.1} parent=1 // pred_region
      %s433 = ssub.s32 128, 128
      %434 = vsyncadd [#allocation4], %s433
      %s436 = sshll.u32 [#allocation10], 4
      %s437 = int_to_ptr.vmem [resolvable:$true] %s436
      %439 = dma.vmem_to_hbm [thread:$0]  %s437, 128, %s7, [#allocation4]
    $region49: #{tpu_custom_call.1} parent=1 // pred_fallthru
      _
    // Predicated region
    $region50: #{tpu_custom_call.1} parent=1 // pred_check
      _
    $region51: #{tpu_custom_call.1} parent=1 // pred_check_branch
      %441 = sbr.rel (0) target = $region53
    $region52: #{tpu_custom_call.1} parent=1 // pred_region
      %442 = dma.done [#allocation4], 128
    $region53: #{tpu_custom_call.1} parent=1 // pred_fallthru
      _
    %443 = vsyncpa [#allocation3], 1
    %444 = vsyncpa [#allocation6], 1
    %445 = vsyncpa [#allocation9], 1
    %446 = vsyncpa [#allocation4], 1

</llo_original>
